<compile_context>
chip_gen: v7x
topology: tpu7x:2x2x1
jax: 0.10.0
libtpu: 0.0.40
codegen_flags: <defaults>
</compile_context>

<pallas_src>
import jax
import jax.numpy as jnp
from jax.experimental import pallas as pl
from jax.experimental.pallas import tpu as pltpu


def _add_pos_tile_kernel(x_ref, emb_ref, o_ref):
    # x_ref / o_ref: (tR, L) tile of one batch element.
    # emb_ref:       matching (tR, L) tile of positional-embedding rows.
    o_ref[...] = x_ref[...] + emb_ref[...].astype(x_ref.dtype)


def _add_pos_bcast_kernel(x_ref, emb_ref, o_ref):
    # x_ref / o_ref: (B, R, L) whole problem; emb_ref: (R, L).
    o_ref[...] = x_ref[...] + emb_ref[...].astype(x_ref.dtype)[None]


def _largest_lane_multiple(total: int, cap: int = 2048):
    """Largest multiple of 128 that divides `total`, at most `cap` (else None)."""
    k = cap // 128
    while k >= 1:
        lanes = 128 * k
        if total % lanes == 0:
            return lanes
        k -= 1
    return None


def positional_encoding(x, emb_table, batched: bool = True, *,
                        use_pallas=None, tile_bytes: int = 2 * 1024 * 1024):
    """Adds positional embeddings (rows 0..S-1 of emb_table) to x.

    x: (B, S, D) if batched else (S, D);  emb_table: (num_positions, D)
    """
    xb = x if batched else x[None]
    squeeze = not batched
    B, S, D = xb.shape
    P, Dt = emb_table.shape
    assert Dt == D, f"d_model mismatch: x has {D}, table has {Dt}"
    assert S <= P, f"sequence length {S} exceeds num_positions {P}"

    # Tiny inputs: a fused XLA add beats kernel-launch overhead.
    if use_pallas is None:
        use_pallas = xb.size >= (1 << 15)
    if not use_pallas:
        pos = jax.lax.slice(emb_table, (0, 0), (S, D)).astype(xb.dtype)
        out = xb + pos[None]
        return out[0] if squeeze else out

    # ---- choose a lane-dense (rows, lanes) view of each (S, D) slab ----
    if D % 128 == 0:
        rows, lanes, reshaped = S, D, False
    else:
        lanes = _largest_lane_multiple(S * D)
        if lanes is not None:
            rows, reshaped = (S * D) // lanes, True
        else:
            # TODO(synk): lane-sparse fallback (neither D nor S*D divisible by 128).
            rows, lanes, reshaped = S, D, False

    itemsize = xb.dtype.itemsize
    x_arr = xb.reshape(B, rows, lanes) if reshaped else xb
    slab_bytes = rows * lanes * itemsize

    def _emb_slab():
        pos = jax.lax.slice(emb_table, (0, 0), (S, D))
        return pos.reshape(rows, lanes) if reshaped else pos

    cost = pl.CostEstimate(
        flops=B * rows * lanes,
        transcendentals=0,
        bytes_accessed=(2 * B * rows * lanes + rows * lanes) * itemsize,
    )

    if B * slab_bytes <= tile_bytes:
        # ---- single-block fast path: whole problem in one grid step ----
        out = pl.pallas_call(
            _add_pos_bcast_kernel,
            out_shape=jax.ShapeDtypeStruct((B, rows, lanes), xb.dtype),
            grid_spec=pltpu.PrefetchScalarGridSpec(
                num_scalar_prefetch=0,
                grid=(1,),
                in_specs=[
                    pl.BlockSpec((B, rows, lanes), lambda i: (0, 0, 0)),  # x
                    pl.BlockSpec((rows, lanes), lambda i: (0, 0)),        # emb
                ],
                out_specs=pl.BlockSpec((B, rows, lanes), lambda i: (0, 0, 0)),
            ),
            compiler_params=pltpu.CompilerParams(
                dimension_semantics=("arbitrary",),
                vmem_limit_bytes=32 * 1024 * 1024,
            ),
            cost_estimate=cost,
        )(x_arr, _emb_slab())
    else:
        # ---- tiled path: rows outer, batch inner (emb tile reused across B) ----
        # Largest row-tile (multiple of 8) whose (tR, lanes) slab is <= tile_bytes.
        target = max(8, (tile_bytes // (lanes * itemsize)) // 8 * 8)
        tR = rows if rows <= target else max(8, (target // 8) * 8)
        ns = pl.cdiv(rows, tR)

        # Positional rows: index the embedding table directly when the block
        # shape is legal against the full table (skips the wrapper-side slice);
        # otherwise slice rows 0..S-1 (and flatten for the lane-dense view).
        if not reshaped and (tR % 8 == 0 or S == P):
            emb_arr = emb_table
        else:
            emb_arr = _emb_slab()

        out = pl.pallas_call(
            _add_pos_tile_kernel,
            out_shape=jax.ShapeDtypeStruct((B, rows, lanes), xb.dtype),
            grid_spec=pltpu.PrefetchScalarGridSpec(
                num_scalar_prefetch=0,
                grid=(ns, B),
                in_specs=[
                    pl.BlockSpec((pl.Squeezed(), tR, lanes), lambda s, b: (b, s, 0)),  # x
                    pl.BlockSpec((tR, lanes), lambda s, b: (s, 0)),                    # emb
                ],
                out_specs=pl.BlockSpec((pl.Squeezed(), tR, lanes), lambda s, b: (b, s, 0)),
            ),
            compiler_params=pltpu.CompilerParams(
                dimension_semantics=("parallel", "parallel"),
                vmem_limit_bytes=32 * 1024 * 1024,
            ),
            cost_estimate=cost,
            # TODO(synk): pass input_output_aliases={0: 0} when the caller donates x.
        )(x_arr, emb_arr)

    out = out.reshape(B, S, D) if reshaped else out
    return out[0] if squeeze else out


if __name__ == "__main__":
    key = jax.random.PRNGKey(0)
    k_emb, k_x, k_emb2, k_x2, k_emb3, k_x3, k_x4 = jax.random.split(key, 7)

    # 1) Shapes implied by the module defaults: d_model=32, num_positions=20.
    #    Exercises the lane-dense flatten ((8,32) -> (1,256)) + single-block path.
    d_model, num_positions, batch, seq = 32, 20, 2, 8
    emb_table = jax.random.normal(k_emb, (num_positions, d_model), dtype=jnp.float32)
    x = jax.random.normal(k_x, (batch, seq, d_model), dtype=jnp.float32)
    out = jax.block_until_ready(
        positional_encoding(x, emb_table, batched=True, use_pallas=True))
    ref = x + emb_table[:seq][None, :, :]
    assert out.shape == x.shape
    assert jnp.allclose(out, ref, atol=1e-6), "batched mismatch vs reference"

    # 2) Unbatched path (S, D).
    out2 = jax.block_until_ready(
        positional_encoding(x[0], emb_table, batched=False, use_pallas=True))
    assert jnp.allclose(out2, x[0] + emb_table[:seq], atol=1e-6), "unbatched mismatch"

    # 3) Lane-dense d_model (D % 128 == 0), single-block path.
    d2, p2, b2, s2 = 128, 64, 2, 16
    emb_table2 = jax.random.normal(k_emb2, (p2, d2), dtype=jnp.float32)
    x2 = jax.random.normal(k_x2, (b2, s2, d2), dtype=jnp.float32)
    out3 = jax.block_until_ready(
        positional_encoding(x2, emb_table2, batched=True, use_pallas=True))
    assert jnp.allclose(out3, x2 + emb_table2[:s2][None], atol=1e-6), "lane-dense mismatch"

    # 4) Tiled path (forced via a small tile budget), evenly divisible rows.
    d3, p3, b3, s3 = 128, 64, 2, 64
    emb_table3 = jax.random.normal(k_emb3, (p3, d3), dtype=jnp.float32)
    x3 = jax.random.normal(k_x3, (b3, s3, d3), dtype=jnp.float32)
    out4 = jax.block_until_ready(
        positional_encoding(x3, emb_table3, batched=True, use_pallas=True,
                            tile_bytes=16 * 1024))
    assert jnp.allclose(out4, x3 + emb_table3[:s3][None], atol=1e-6), "tiled mismatch"

    # 5) Tiled path with a ragged last row-tile (masked partial stores).
    s4 = 40
    x4 = jax.random.normal(k_x4, (b3, s4, d3), dtype=jnp.float32)
    out5 = jax.block_until_ready(
        positional_encoding(x4, emb_table3, batched=True, use_pallas=True,
                            tile_bytes=16 * 1024))
    assert jnp.allclose(out5, x4 + emb_table3[:s4][None], atol=1e-6), "ragged tiled mismatch"

    print("KERNEL_OK")
</pallas_src>

<mosaic_0001>
module attributes {stable_mosaic.version = 11 : i64} {
  func.func @_add_pos_bcast_kernel(%arg0: i32, %arg1: memref<2x1x256xf32, #tpu.memory_space<vmem>>, %arg2: memref<1x256xf32, #tpu.memory_space<vmem>>, %arg3: memref<2x1x256xf32, #tpu.memory_space<vmem>>) attributes {dimension_semantics = [#tpu.dimension_semantics<arbitrary>], iteration_bounds = array<i64: 1>, scalar_prefetch = 0 : i64, scratch_operands = 0 : i64, tpu.core_type = #tpu.core_type<tc>, window_params = [{pipeline_mode = #tpu.pipeline_mode<synchronous>, transform_indices = @transform_0, window_bounds = array<i64: 2, 1, 256>}, {pipeline_mode = #tpu.pipeline_mode<synchronous>, transform_indices = @transform_1, window_bounds = array<i64: 1, 256>}, {pipeline_mode = #tpu.pipeline_mode<synchronous>, transform_indices = @transform_2, window_bounds = array<i64: 2, 1, 256>}]} {
    %c0 = arith.constant 0 : index
    %c0_0 = arith.constant 0 : index
    %c0_1 = arith.constant 0 : index
    %0 = vector.load %arg1[%c0, %c0_0, %c0_1] : memref<2x1x256xf32, #tpu.memory_space<vmem>>, vector<2x1x256xf32>
    %c0_2 = arith.constant 0 : index
    %c0_3 = arith.constant 0 : index
    %1 = vector.load %arg2[%c0_2, %c0_3] : memref<1x256xf32, #tpu.memory_space<vmem>>, vector<1x256xf32>
    %2 = vector.shape_cast %1 : vector<1x256xf32> to vector<1x1x256xf32>
    %3 = vector.broadcast %2 : vector<1x1x256xf32> to vector<2x1x256xf32>
    %4 = arith.addf %0, %3 : vector<2x1x256xf32>
    %c0_4 = arith.constant 0 : index
    %c0_5 = arith.constant 0 : index
    %c0_6 = arith.constant 0 : index
    %5 = vector.load %arg3[%c0_4, %c0_5, %c0_6] : memref<2x1x256xf32, #tpu.memory_space<vmem>>, vector<2x1x256xf32>
    tpu.vector_store %arg3[%c0_4, %c0_5, %c0_6], %4 {strides = array<i32>} : memref<2x1x256xf32, #tpu.memory_space<vmem>>, vector<2x1x256xf32>,
    return
  }
  func.func @transform_0(%arg0: i32) -> (i32, i32, i32) {
    %c0_i32 = arith.constant 0 : i32
    %c0_i32_0 = arith.constant 0 : i32
    %c0_i32_1 = arith.constant 0 : i32
    %c0_i32_2 = arith.constant 0 : i32
    return %c0_i32, %c0_i32_0, %c0_i32_1 : i32, i32, i32
  }
  func.func @transform_1(%arg0: i32) -> (i32, i32) {
    %c0_i32 = arith.constant 0 : i32
    %c0_i32_0 = arith.constant 0 : i32
    %c0_i32_1 = arith.constant 0 : i32
    return %c0_i32, %c0_i32_0 : i32, i32
  }
  func.func @transform_2(%arg0: i32) -> (i32, i32, i32) {
    %c0_i32 = arith.constant 0 : i32
    %c0_i32_0 = arith.constant 0 : i32
    %c0_i32_1 = arith.constant 0 : i32
    %c0_i32_2 = arith.constant 0 : i32
    return %c0_i32, %c0_i32_0, %c0_i32_1 : i32, i32, i32
  }
}

</mosaic_0001>

<llo_original>
// kernel: tpu_custom_call.1
$region0: #{tpu_custom_call.1}
  #allocation0 [shape = 'u32[]', space=smem, size = 0x4, offset = 0x4, fixed_abs, tag = 'smem constant byte address 0x4 - core index']
  #allocation1 [shape = 'u32[144,128]{1,0:T(1,128)}', space=vmem, size = 0x12000, scoped, tag = 'internal scratch']
  %s0 = inlined_call_operand.hbm [shape: f32[2,1,256], index: 0, kind: input, shape index: {}]
  %s1 = inlined_call_operand.vmem [shape: f32[1,256], index: 1, kind: input, shape index: {}]
  %s2 = inlined_call_operand.hbm [shape: f32[2,1,256], index: 2, kind: output, shape index: {}]
  %s3 = sld [smem:[#allocation0]]
  $region22: #{tpu_custom_call.1} parent=0
    _
  %s5 = ssub.s32 1, %s3
  %s6 = scalar_select 0, %s5, %s3
  $region1: #{tpu_custom_call.1} parent=0
    #allocation2 [shape = 'u8[2048]{0}', space=vmem, size = 0x800, scoped, tag = 'input window, operand 0, single buffered']
    #allocation3 [shape = 's32[1]{0}', space=sflag, size = 0x4, scoped, tag = 'scoped memory for tpu_custom_call.1']
    #allocation4 [shape = 's32[1]{0}', space=sflag, size = 0x4, scoped, tag = 'scoped memory for tpu_custom_call.1']
    #allocation5 [shape = 'u8[2048]{0}', space=vmem, size = 0x800, scoped, tag = 'output window, operand 0, single buffered']
    %7 = vsyncpa [#allocation3], 0
    %8 = vsyncpa [#allocation4], 0
    // Predicated region
    $region2: #{tpu_custom_call.1} parent=1 // pred_check
      _
    $region3: #{tpu_custom_call.1} parent=1 // pred_check_branch
      %10 = sbr.rel (0) target = $region5
    $region4: #{tpu_custom_call.1} parent=1 // pred_region
      %s12 = ssub.s32 64, 64
      %13 = vsyncadd [#allocation3], %s12
      %s14 = sshll.u32 [#allocation2], 4
      %s15 = int_to_ptr.vmem [resolvable:$true] %s14
      %20 = dma.hbm_to_vmem [thread:$0]  %s0, 64, %s15, [#allocation3], 32, 32, 2
    $region5: #{tpu_custom_call.1} parent=1 // pred_fallthru
      _
    // Predicated region
    $region6: #{tpu_custom_call.1} parent=1 // pred_check
      _
    $region7: #{tpu_custom_call.1} parent=1 // pred_check_branch
      %22 = sbr.rel (0) target = $region9
    $region8: #{tpu_custom_call.1} parent=1 // pred_region
      _
    $region9: #{tpu_custom_call.1} parent=1 // pred_fallthru
      _
    // Predicated region
    $region10: #{tpu_custom_call.1} parent=1 // pred_check
      _
    $region11: #{tpu_custom_call.1} parent=1 // pred_check_branch
      %24 = sbr.rel (0) target = $region13
    $region12: #{tpu_custom_call.1} parent=1 // pred_region
      %25 = dma.done [#allocation3], 64
    $region13: #{tpu_custom_call.1} parent=1 // pred_fallthru
      _
    %v26 = vld [vmem:[#allocation2] sm:$0x3]
    %v27 = vld [vmem:[#allocation2 + $0x2] sm:$0x3]
    %v28 = vld [vmem:[%s1] sm:$0x3]
    %v29 = vadd.f32 %v26, %v28
    %v30 = vadd.f32 %v27, %v28
    %v31 = vlaneseq
    %vm32 = vcmp.ge.s32.totalorder %v31, 0
    %vm33 = vcmp.lt.s32.totalorder %v31, 256
    %vm34 = vmand %vm32, %vm33
    %35 = vst.msk [vmem:[#allocation5] sm:$0x3] %vm34, %v29
    %36 = vst.msk [vmem:[#allocation5 + $0x2] sm:$0x3] %vm34, %v30
    // Predicated region
    $region14: #{tpu_custom_call.1} parent=1 // pred_check
      _
    $region15: #{tpu_custom_call.1} parent=1 // pred_check_branch
      %38 = sbr.rel (0) target = $region17
    $region16: #{tpu_custom_call.1} parent=1 // pred_region
      %s40 = ssub.s32 64, 64
      %41 = vsyncadd [#allocation4], %s40
      %s42 = sshll.u32 [#allocation5], 4
      %s43 = int_to_ptr.vmem [resolvable:$true] %s42
      %48 = dma.vmem_to_hbm [thread:$0]  %s43, 64, %s2, [#allocation4], 32, 32, 2
    $region17: #{tpu_custom_call.1} parent=1 // pred_fallthru
      _
    // Predicated region
    $region18: #{tpu_custom_call.1} parent=1 // pred_check
      _
    $region19: #{tpu_custom_call.1} parent=1 // pred_check_branch
      %50 = sbr.rel (0) target = $region21
    $region20: #{tpu_custom_call.1} parent=1 // pred_region
      %51 = dma.done [#allocation4], 64
    $region21: #{tpu_custom_call.1} parent=1 // pred_fallthru
      _
    %52 = vsyncpa [#allocation3], 1
    %53 = vsyncpa [#allocation4], 1

</llo_original>
